<compile_context>
chip_gen: v5e
topology: v5e:2x2
jax: 0.10.0
libtpu: 0.0.40
codegen_flags: <defaults>
</compile_context>

<pallas_src>
import jax
import jax.numpy as jnp
from jax import lax
from jax.experimental import pallas as pl
from jax.experimental.pallas import tpu as pltpu


# ---------------------------------------------------------------------------
# One-time init kernel: fused LUT = relu( relu(emb_table) @ lin_w^T + lin_b )
# ---------------------------------------------------------------------------
def _fuse_table_kernel(table_ref, w_ref, b_ref, out_ref):
    # table_ref: (TV, D) f32  -- tile of nn.Embedding weight rows
    # w_ref:     (D, D)  f32  -- nn.Linear weight [out, in] (NOT pre-transposed)
    # b_ref:     (1, D)  f32  -- nn.Linear bias
    # out_ref:   (TV, D) f32  -- tile of the fused LUT
    h = jnp.maximum(table_ref[...], 0.0)                  # inner ReLU
    y = lax.dot_general(                                  # h @ W^T (contract dim1 vs dim1)
        h, w_ref[...],
        dimension_numbers=(((1,), (1,)), ((), ())),
        preferred_element_type=jnp.float32,
    )
    out_ref[...] = jnp.maximum(y + b_ref[...], 0.0).astype(out_ref.dtype)   # outer ReLU


def precompute_fused_table(emb_table, lin_w, lin_b, *, row_tile=512):
    """Run once per parameter set ("module init"); returns the (V, D) fused LUT."""
    V, D = emb_table.shape
    tv = V if V <= row_tile else row_tile                 # tile V to bound VMEM
    grid = (pl.cdiv(V, tv),)
    return pl.pallas_call(
        _fuse_table_kernel,
        out_shape=jax.ShapeDtypeStruct((V, D), jnp.float32),
        grid_spec=pltpu.PrefetchScalarGridSpec(
            num_scalar_prefetch=0,
            grid=grid,
            in_specs=[
                pl.BlockSpec((tv, D), lambda i: (i, 0)),   # table tile
                pl.BlockSpec((D, D), lambda i: (0, 0)),    # W resident
                pl.BlockSpec((1, D), lambda i: (0, 0)),    # bias resident
            ],
            out_specs=pl.BlockSpec((tv, D), lambda i: (i, 0)),
        ),
        compiler_params=pltpu.CompilerParams(
            dimension_semantics=("parallel",),             # shards V across TCs (v7x)
        ),
    )(
        emb_table.astype(jnp.float32),
        lin_w.astype(jnp.float32),
        lin_b.reshape(1, D).astype(jnp.float32),
    )
    # TODO(synk): if V ever becomes large enough that init time matters on v6e/v7x,
    # cast relu(table) and W to bf16 for the MXU (keep f32 accumulation) and relax
    # the test tolerance accordingly.


# ---------------------------------------------------------------------------
# Per-call forward kernel: out = fused_table[task_indices]     (pure gather)
# LUT stays in HBM; B row DMAs into a VMEM scratch; one full (B, D) store.
# ---------------------------------------------------------------------------
def _gather_rows_hbm_kernel(idx_ref, lut_hbm_ref, out_ref, row_buf, sem):
    # idx_ref:     (B,)   int32 in SMEM   -- scalar addressing data
    # lut_hbm_ref: (V, D) f32 in HBM (pl.ANY) -- fused LUT, never fully resident
    # out_ref:     (B, D) f32 in VMEM
    # row_buf:     (B, D) f32 VMEM scratch
    # sem:         (B,)   DMA semaphores
    B = out_ref.shape[0]
    # Issue all row DMAs first so they overlap in flight, then wait.
    for b in range(B):                                   # B is small & static
        i = idx_ref[b]
        pltpu.make_async_copy(
            lut_hbm_ref.at[pl.ds(i, 1), :], row_buf.at[pl.ds(b, 1), :], sem.at[b]
        ).start()
    for b in range(B):
        i = idx_ref[b]
        pltpu.make_async_copy(
            lut_hbm_ref.at[pl.ds(i, 1), :], row_buf.at[pl.ds(b, 1), :], sem.at[b]
        ).wait()
    out_ref[...] = row_buf[...]                          # single unmasked (B, D) store
    # TODO(synk): if B ever grows beyond ~16, switch to a grid over B (scalar-prefetch
    # index_map) or lax.fori_loop and gather (8, 128) blocks at a time.


def base_task_encoder_forward(task_indices, fused_table):
    """Pallas forward: task_indices (B,) int -> (B, D) f32, gathering from the HBM LUT.

    Per-call HBM traffic is B*D*4 bytes and VMEM usage is independent of V, so this
    path needs no per-generation retuning (v5e 16 MiB scoped / v7x 64 MiB VMEM).
    """
    B = task_indices.shape[0]
    V, D = fused_table.shape
    return pl.pallas_call(
        _gather_rows_hbm_kernel,
        out_shape=jax.ShapeDtypeStruct((B, D), jnp.float32),
        in_specs=[
            pl.BlockSpec(memory_space=pltpu.MemorySpace.SMEM),   # indices -> SMEM
            pl.BlockSpec(memory_space=pl.ANY),                   # LUT stays in HBM
        ],
        out_specs=pl.BlockSpec(memory_space=pltpu.MemorySpace.VMEM),
        scratch_shapes=[
            pltpu.VMEM((B, D), jnp.float32),
            pltpu.SemaphoreType.DMA((B,)),
        ],
    )(task_indices.astype(jnp.int32), fused_table)


def base_task_encoder_forward_xla(task_indices, fused_table):
    """No-kernel path (review: 'the cheapest kernel is no kernel' at 8x128).

    Use this when the consumer is ordinary XLA so the gather fuses into the graph;
    both ReLUs and the Linear are already baked into fused_table.
    """
    return fused_table[task_indices]


# ---------------------------------------------------------------------------
# Pure-JAX reference (unfused), for correctness checking.
# ---------------------------------------------------------------------------
def reference(task_indices, emb_table, lin_w, lin_b):
    e = emb_table[task_indices]                        # (B, D)
    h = jnp.maximum(e, 0.0)
    y = jnp.dot(h, lin_w.T, precision=lax.Precision.HIGHEST) + lin_b
    return jnp.maximum(y, 0.0)


if __name__ == "__main__":
    # Small shapes consistent with the module's forward.
    num_embeddings = 16
    embedding_dim = 128
    batch = 8

    key = jax.random.PRNGKey(0)
    k_tab, k_w, k_b, k_idx = jax.random.split(key, 4)

    # nn.Embedding default init: N(0, 1)
    emb_table = jax.random.normal(k_tab, (num_embeddings, embedding_dim), dtype=jnp.float32)
    # nn.Linear default init: U(-1/sqrt(in), 1/sqrt(in))
    bound = 1.0 / (embedding_dim ** 0.5)
    lin_w = jax.random.uniform(k_w, (embedding_dim, embedding_dim),
                               minval=-bound, maxval=bound, dtype=jnp.float32)
    lin_b = jax.random.uniform(k_b, (embedding_dim,),
                               minval=-bound, maxval=bound, dtype=jnp.float32)

    task_indices = jax.random.randint(k_idx, (batch,), 0, num_embeddings, dtype=jnp.int32)

    # One-time precompute (plays the role of module init; amortized over forward calls).
    fused_table = jax.block_until_ready(precompute_fused_table(emb_table, lin_w, lin_b))

    # Per-call forward: Pallas gather kernel + the fused no-kernel XLA path.
    out = jax.block_until_ready(base_task_encoder_forward(task_indices, fused_table))
    out_xla = jax.block_until_ready(base_task_encoder_forward_xla(task_indices, fused_table))

    ref = reference(task_indices, emb_table, lin_w, lin_b)
    assert out.shape == (batch, embedding_dim)
    assert jnp.allclose(out, ref, atol=1e-5, rtol=1e-5), "pallas forward mismatch vs reference"
    assert jnp.allclose(out_xla, ref, atol=1e-5, rtol=1e-5), "xla forward mismatch vs reference"

    print("KERNEL_OK")
</pallas_src>

<mosaic_0001>
module attributes {stable_mosaic.version = 11 : i64} {
  func.func @_fuse_table_kernel(%arg0: i32, %arg1: memref<16x128xf32, #tpu.memory_space<vmem>>, %arg2: memref<128x128xf32, #tpu.memory_space<vmem>>, %arg3: memref<1x128xf32, #tpu.memory_space<vmem>>, %arg4: memref<16x128xf32, #tpu.memory_space<vmem>>) attributes {dimension_semantics = [#tpu.dimension_semantics<parallel>], iteration_bounds = array<i64: 1>, scalar_prefetch = 0 : i64, scratch_operands = 0 : i64, tpu.core_type = #tpu.core_type<tc>, window_params = [{transform_indices = @transform_0, window_bounds = array<i64: 16, 128>}, {pipeline_mode = #tpu.pipeline_mode<synchronous>, transform_indices = @transform_1, window_bounds = array<i64: 128, 128>}, {pipeline_mode = #tpu.pipeline_mode<synchronous>, transform_indices = @transform_2, window_bounds = array<i64: 1, 128>}, {transform_indices = @transform_3, window_bounds = array<i64: 16, 128>}]} {
    %c0 = arith.constant 0 : index
    %c0_0 = arith.constant 0 : index
    %0 = vector.load %arg1[%c0, %c0_0] : memref<16x128xf32, #tpu.memory_space<vmem>>, vector<16x128xf32>
    %cst = arith.constant 0.000000e+00 : f32
    %1 = vector.broadcast %cst : f32 to vector<16x128xf32>
    %2 = arith.maximumf %0, %1 : vector<16x128xf32>
    %c0_1 = arith.constant 0 : index
    %c0_2 = arith.constant 0 : index
    %3 = vector.load %arg2[%c0_1, %c0_2] : memref<128x128xf32, #tpu.memory_space<vmem>>, vector<128x128xf32>
    %cst_3 = arith.constant dense<0.000000e+00> : vector<16x128xf32>
    %4 = tpu.matmul %2, %3, %cst_3 {dimension_numbers = #tpu.dot_dimension_numbers<[1], [1], [0], [0], [0, 0, 1, 0], [], []>} : vector<16x128xf32>, vector<128x128xf32>, vector<16x128xf32> -> vector<16x128xf32>
    %c0_4 = arith.constant 0 : index
    %c0_5 = arith.constant 0 : index
    %5 = vector.load %arg3[%c0_4, %c0_5] : memref<1x128xf32, #tpu.memory_space<vmem>>, vector<1x128xf32>
    %6 = vector.broadcast %5 : vector<1x128xf32> to vector<16x128xf32>
    %7 = arith.addf %4, %6 : vector<16x128xf32>
    %cst_6 = arith.constant 0.000000e+00 : f32
    %8 = vector.broadcast %cst_6 : f32 to vector<16x128xf32>
    %9 = arith.maximumf %7, %8 : vector<16x128xf32>
    %c0_7 = arith.constant 0 : index
    %c0_8 = arith.constant 0 : index
    %10 = vector.load %arg4[%c0_7, %c0_8] : memref<16x128xf32, #tpu.memory_space<vmem>>, vector<16x128xf32>
    tpu.vector_store %arg4[%c0_7, %c0_8], %9 {strides = array<i32>} : memref<16x128xf32, #tpu.memory_space<vmem>>, vector<16x128xf32>,
    return
  }
  func.func @transform_0(%arg0: i32) -> (i32, i32) {
    %c0_i32 = arith.constant 0 : i32
    %c0_i32_0 = arith.constant 0 : i32
    return %arg0, %c0_i32 : i32, i32
  }
  func.func @transform_1(%arg0: i32) -> (i32, i32) {
    %c0_i32 = arith.constant 0 : i32
    %c0_i32_0 = arith.constant 0 : i32
    %c0_i32_1 = arith.constant 0 : i32
    return %c0_i32, %c0_i32_0 : i32, i32
  }
  func.func @transform_2(%arg0: i32) -> (i32, i32) {
    %c0_i32 = arith.constant 0 : i32
    %c0_i32_0 = arith.constant 0 : i32
    %c0_i32_1 = arith.constant 0 : i32
    return %c0_i32, %c0_i32_0 : i32, i32
  }
  func.func @transform_3(%arg0: i32) -> (i32, i32) {
    %c0_i32 = arith.constant 0 : i32
    %c0_i32_0 = arith.constant 0 : i32
    return %arg0, %c0_i32 : i32, i32
  }
}

</mosaic_0001>

<llo_original>
// kernel: tpu_custom_call.1
$region0: #{tpu_custom_call.1}
  #allocation0 [shape = 'u32[]', space=smem, size = 0x4, offset = 0x4, fixed_abs, tag = 'smem constant byte address 0x4 - core index']
  #allocation1 [shape = 'u32[72,128]{1,0:T(1,128)}', space=vmem, size = 0x9000, scoped, tag = 'internal scratch']
  %s0 = inlined_call_operand.hbm [shape: f32[16,128], index: 0, kind: input, shape index: {}]
  %s1 = inlined_call_operand.hbm [shape: f32[128,128], index: 1, kind: input, shape index: {}]
  %s2 = inlined_call_operand.vmem [shape: f32[1,128], index: 2, kind: input, shape index: {}]
  %s3 = inlined_call_operand.hbm [shape: f32[16,128], index: 3, kind: output, shape index: {}]
  %s4 = sld [smem:[#allocation0]]
  $region30: #{tpu_custom_call.1} parent=0
    _
  %s6 = ssub.s32 1, %s4
  %s7 = scalar_select 0, %s6, %s4
  $region1: #{tpu_custom_call.1} parent=0
    #allocation2 [shape = 'u8[8192]{0}', space=vmem, size = 0x2000, scoped, tag = 'input window, operand 0, single buffered']
    #allocation3 [shape = 's32[1]{0}', space=sflag, size = 0x4, scoped, tag = 'scoped memory for tpu_custom_call.1']
    #allocation4 [shape = 's32[1]{0}', space=sflag, size = 0x4, scoped, tag = 'scoped memory for tpu_custom_call.1']
    #allocation5 [shape = 'u8[65536]{0}', space=vmem, size = 0x10000, scoped, tag = 'input window, operand 1, single buffered']
    #allocation6 [shape = 's32[1]{0}', space=sflag, size = 0x4, scoped, tag = 'scoped memory for tpu_custom_call.1']
    #allocation7 [shape = 'u8[8192]{0}', space=vmem, size = 0x2000, scoped, tag = 'output window, operand 0, single buffered']
    %8 = vsyncpa [#allocation3], 0
    %9 = vsyncpa [#allocation6], 0
    %10 = vsyncpa [#allocation4], 0
    // Predicated region
    $region2: #{tpu_custom_call.1} parent=1 // pred_check
      _
    $region3: #{tpu_custom_call.1} parent=1 // pred_check_branch
      %12 = sbr.rel (0) target = $region5
    $region4: #{tpu_custom_call.1} parent=1 // pred_region
      %14 = vsyncadd [#allocation3], 0
      %s15 = sshll.u32 %s0, 4
      %s16 = int_to_ptr.hbm [resolvable:$true] %s15
      %s17 = sshll.u32 [#allocation2], 4
      %s18 = int_to_ptr.vmem [resolvable:$true] %s17
      %23 = dma.hbm_to_vmem [thread:$0]  %s16, 256, %s18, [#allocation3], 128, 128, 8
    $region5: #{tpu_custom_call.1} parent=1 // pred_fallthru
      _
    // Predicated region
    $region6: #{tpu_custom_call.1} parent=1 // pred_check
      _
    $region7: #{tpu_custom_call.1} parent=1 // pred_check_branch
      %25 = sbr.rel (0) target = $region9
    $region8: #{tpu_custom_call.1} parent=1 // pred_region
      %27 = vsyncadd [#allocation6], 0
      %s28 = sshll.u32 %s1, 4
      %s29 = int_to_ptr.hbm [resolvable:$true] %s28
      %s30 = sshll.u32 [#allocation5], 4
      %s31 = int_to_ptr.vmem [resolvable:$true] %s30
      %36 = dma.hbm_to_vmem [thread:$0]  %s29, 2048, %s31, [#allocation6], 128, 128, 8
    $region9: #{tpu_custom_call.1} parent=1 // pred_fallthru
      _
    // Predicated region
    $region10: #{tpu_custom_call.1} parent=1 // pred_check
      _
    $region11: #{tpu_custom_call.1} parent=1 // pred_check_branch
      %38 = sbr.rel (0) target = $region13
    $region12: #{tpu_custom_call.1} parent=1 // pred_region
      _
    $region13: #{tpu_custom_call.1} parent=1 // pred_fallthru
      _
    // Predicated region
    $region14: #{tpu_custom_call.1} parent=1 // pred_check
      _
    $region15: #{tpu_custom_call.1} parent=1 // pred_check_branch
      %40 = sbr.rel (0) target = $region17
    $region16: #{tpu_custom_call.1} parent=1 // pred_region
      %42 = dma.done [#allocation3], 256
    $region17: #{tpu_custom_call.1} parent=1 // pred_fallthru
      _
    // Predicated region
    $region18: #{tpu_custom_call.1} parent=1 // pred_check
      _
    $region19: #{tpu_custom_call.1} parent=1 // pred_check_branch
      %44 = sbr.rel (0) target = $region21
    $region20: #{tpu_custom_call.1} parent=1 // pred_region
      %46 = dma.done [#allocation6], 2048
    $region21: #{tpu_custom_call.1} parent=1 // pred_fallthru
      _
    %v47 = vld [vmem:[#allocation2] sm:$0xff]
    %v48 = vld [vmem:[#allocation2 + $0x8] sm:$0xff]
    %v49 = vmax.f32 %v47, 0.0
    %v50 = vmax.f32 %v48, 0.0
    %v51 = vld [vmem:[#allocation5] sm:$0xff]
    %v52 = vld [vmem:[#allocation5 + $0x8] sm:$0xff]
    %v53 = vld [vmem:[#allocation5 + $0x10] sm:$0xff]
    %v54 = vld [vmem:[#allocation5 + $0x18] sm:$0xff]
    %v55 = vld [vmem:[#allocation5 + $0x20] sm:$0xff]
    %v56 = vld [vmem:[#allocation5 + $0x28] sm:$0xff]
    %v57 = vld [vmem:[#allocation5 + $0x30] sm:$0xff]
    %v58 = vld [vmem:[#allocation5 + $0x38] sm:$0xff]
    %v59 = vld [vmem:[#allocation5 + $0x40] sm:$0xff]
    %v60 = vld [vmem:[#allocation5 + $0x48] sm:$0xff]
    %v61 = vld [vmem:[#allocation5 + $0x50] sm:$0xff]
    %v62 = vld [vmem:[#allocation5 + $0x58] sm:$0xff]
    %v63 = vld [vmem:[#allocation5 + $0x60] sm:$0xff]
    %v64 = vld [vmem:[#allocation5 + $0x68] sm:$0xff]
    %v65 = vld [vmem:[#allocation5 + $0x70] sm:$0xff]
    %v66 = vld [vmem:[#allocation5 + $0x78] sm:$0xff]
    %v67 = vld [vmem:[%s2] sm:$0x1]
    %v69 = vperm.slane %v67, 0
    %71 = vmatpush.xpose.msra.mxu0 %v66
    %72 = vmatpush.xpose.msra.mxu0 %v65
    %73 = vmatpush.xpose.msra.mxu0 %v64
    %74 = vmatpush.xpose.msra.mxu0 %v63
    %75 = vmatpush.xpose.msra.mxu0 %v62
    %76 = vmatpush.xpose.msra.mxu0 %v61
    %77 = vmatpush.xpose.msra.mxu0 %v60
    %78 = vmatpush.xpose.msra.mxu0 %v59
    %79 = vmatpush.xpose.msra.mxu0 %v58
    %80 = vmatpush.xpose.msra.mxu0 %v57
    %81 = vmatpush.xpose.msra.mxu0 %v56
    %82 = vmatpush.xpose.msra.mxu0 %v55
    %83 = vmatpush.xpose.msra.mxu0 %v54
    %84 = vmatpush.xpose.msra.mxu0 %v53
    %85 = vmatpush.xpose.msra.mxu0 %v52
    %86 = vmatpush.xpose.msra.mxu0 %v51
    %87 = vmatmul.f32.gmra.mxu0 %v49
    %v88 = vpop.f32.mrf.mxu0
    %v89 = vadd.f32 %v69, %v88
    %90 = vmatmul.f32.gmra.mxu0 %v50
    %v91 = vpop.f32.mrf.mxu0
    %v92 = vadd.f32 %v69, %v91
    %93 = vdwg.mxu0
    %v94 = vmax.f32 %v89, 0.0
    %v95 = vmax.f32 %v92, 0.0
    %96 = vst [vmem:[#allocation7] sm:$0xff] %v94
    %97 = vst [vmem:[#allocation7 + $0x8] sm:$0xff] %v95
    // Predicated region
    $region22: #{tpu_custom_call.1} parent=1 // pred_check
      _
    $region23: #{tpu_custom_call.1} parent=1 // pred_check_branch
      %99 = sbr.rel (0) target = $region25
    $region24: #{tpu_custom_call.1} parent=1 // pred_region
      %101 = vsyncadd [#allocation4], 0
      %s102 = sshll.u32 [#allocation7], 4
      %s103 = int_to_ptr.vmem [resolvable:$true] %s102
      %s104 = sshll.u32 %s3, 4
      %s105 = int_to_ptr.hbm [resolvable:$true] %s104
      %110 = dma.vmem_to_hbm [thread:$0]  %s103, 256, %s105, [#allocation4], 128, 128, 8
    $region25: #{tpu_custom_call.1} parent=1 // pred_fallthru
      _
    // Predicated region
    $region26: #{tpu_custom_call.1} parent=1 // pred_check
      _
    $region27: #{tpu_custom_call.1} parent=1 // pred_check_branch
      %112 = sbr.rel (0) target = $region29
    $region28: #{tpu_custom_call.1} parent=1 // pred_region
      %114 = dma.done [#allocation4], 256
    $region29: #{tpu_custom_call.1} parent=1 // pred_fallthru
      _
    %115 = vsyncpa [#allocation3], 1
    %116 = vsyncpa [#allocation6], 1
    %117 = vsyncpa [#allocation4], 1

</llo_original>
